<compile_context>
chip_gen: v7x
topology: tpu7x:2x2x1
jax: 0.10.0
libtpu: 0.0.40
codegen_flags: <defaults>
</compile_context>

<pallas_src>
import numpy as np

import jax
import jax.numpy as jnp
from jax import lax
from jax.experimental import pallas as pl
from jax.experimental.pallas import tpu as pltpu


# ----------------------------------------------------------------------------
# Kernel
# ----------------------------------------------------------------------------
def _pa_kernel(x_ref, halo_ref, a_ref, b1_ref, bexp_ref, b2_ref, o_ref):
    """One (batch, row-tile) grid step.

    x_ref    : (1, tH, W*C)     centre rows, lane-dense (W*C multiple of 128)
    halo_ref : (1, 1, 2, W*C)   [row above tile, row below tile]; zeroed at the
                                image border by the wrapper
    a_ref    : (3, W*C, W*mid)  3x3 conv folded per dy (W padding baked in)
    b1_ref   : (1, W*mid)       conv1 bias tiled over W
    bexp_ref : (W*mid, W*C)     1x1 conv weights folded with the C-broadcast
    b2_ref   : (1,) in SMEM     conv2 bias (scalar)
    o_ref    : (1, tH, W*C)
    """
    tH = x_ref.shape[1]
    wmid = a_ref.shape[2]

    # Upcast once to f32 (v5e-safe; negligible on v6e/v7x — kernel is mem-bound).
    x_center = x_ref[0].astype(jnp.float32)                       # (tH, WC)
    halo = halo_ref[0, 0].astype(jnp.float32)                     # (2, WC)
    xbuf = jnp.concatenate([halo[0:1], x_center, halo[1:2]], axis=0)  # (tH+2, WC)

    # 3x3 conv: one MXU matmul per dy on the whole row slab, then shift-add.
    acc = jnp.zeros((tH, wmid), jnp.float32)
    for dy in range(3):
        p = jnp.dot(xbuf, a_ref[dy], preferred_element_type=jnp.float32)
        acc = acc + p[dy:dy + tH, :]
    acc = jnp.maximum(acc + b1_ref[...], 0.0)                     # bias + ReLU

    # 1x1 conv + bias + sigmoid, already broadcast over C (folded into bexp).
    logits = jnp.dot(acc, bexp_ref[...],
                     preferred_element_type=jnp.float32) + b2_ref[0]
    y = jax.nn.sigmoid(logits)                                    # (tH, WC)

    # Pixel attention: lane-dense store.
    o_ref[0] = (x_center * y).astype(o_ref.dtype)


# ----------------------------------------------------------------------------
# Host-side parameter folding (one-time, like any weight preprocessing)
# ----------------------------------------------------------------------------
def fold_pa_params(conv1_w, conv1_b, conv2_w, conv2_b, *, width):
    """Fold PyTorch PALayer weights into matrices acting on the (H, W*C) layout.

    conv1_w : (mid, C, 3, 3)   nn.Conv2d(channel, channel//8, 3, padding=1).weight
    conv1_b : (mid,)
    conv2_w : (1, mid, 1, 1)   nn.Conv2d(channel//8, 1, 1).weight
    conv2_b : (1,)
    """
    w1 = np.asarray(conv1_w, np.float32)
    b1 = np.asarray(conv1_b, np.float32)
    w2 = np.asarray(conv2_w, np.float32).reshape(-1)       # (mid,)
    b2 = np.asarray(conv2_b, np.float32).reshape(-1)[:1]   # (1,)
    mid, C = w1.shape[0], w1.shape[1]
    W = width
    WC, Wmid = W * C, W * mid

    # A[dy][(w_in)*C + c, w_out*mid + m] = w1[m, c, dy, dx] with w_in = w_out+dx-1.
    # Out-of-image w_in (the Conv2d padding=1 along W) simply has no entry.
    A = np.zeros((3, WC, Wmid), np.float32)
    for dy in range(3):
        for dx in range(3):
            tap = w1[:, :, dy, dx].T                        # (C, mid)
            for w in range(W):
                w_in = w + dx - 1
                if 0 <= w_in < W:
                    A[dy, w_in * C:(w_in + 1) * C, w * mid:(w + 1) * mid] += tap

    b1_tiled = np.tile(b1, W).reshape(1, Wmid)              # w-major, mid-minor

    # Bexp[w*mid + m, w*C + c] = w2[m]: 1x1 conv + broadcast of y over C.
    Bexp = np.zeros((Wmid, WC), np.float32)
    for w in range(W):
        Bexp[w * mid:(w + 1) * mid, w * C:(w + 1) * C] = w2[:, None]

    return (jnp.asarray(A), jnp.asarray(b1_tiled), jnp.asarray(Bexp),
            jnp.asarray(b2, jnp.float32))


# ----------------------------------------------------------------------------
# Wrapper helpers
# ----------------------------------------------------------------------------
def _choose_tile_h(H, WC, dtype, n_batch, budget_bytes=2 * 1024 * 1024):
    """Row-tile height: divides H, keeps sublane tiling (multiple of 8 for f32 /
    16 for bf16, or full H), fits a modest per-block VMEM budget (room for
    double-buffered in+out blocks well under v5e's 16 MiB / v7x's 32 MiB scoped
    VMEM). Prefer the LARGEST fitting tile (fewer ~0.35us grid steps, fewer halo
    rows); only when N == 1 force >=2 tiles along H so megacore still has a
    parallel grid axis to shard."""
    itemsize = jnp.dtype(dtype).itemsize
    sub = 8 * max(1, 4 // itemsize)
    max_rows = max(sub, budget_bytes // (WC * itemsize))
    divs = [d for d in range(1, H + 1)
            if H % d == 0 and (d % sub == 0 or d == H) and d <= max_rows]
    if not divs:
        return H
    if n_batch == 1:
        proper = [d for d in divs if d < H]
        if proper:
            return max(proper)
    return max(divs)


def _build_halo(x_flat, tH):
    """(N, nH, 2, WC): for tile h, [row just above, row just below], zero at the
    image border — replaces a full-tensor HBM pad with a ~2/tH-sized gather."""
    N, H, WC = x_flat.shape
    nH = H // tH
    xt = x_flat.reshape(N, nH, tH, WC)
    zero = jnp.zeros((N, 1, 1, WC), x_flat.dtype)
    top = jnp.concatenate([zero, xt[:, :-1, tH - 1:tH, :]], axis=1)
    bot = jnp.concatenate([xt[:, 1:, 0:1, :], zero], axis=1)
    return jnp.concatenate([top, bot], axis=2)


# ----------------------------------------------------------------------------
# Public entry points
# ----------------------------------------------------------------------------
def pa_layer_flat(x_flat, params):
    """Core path. x_flat: (N, H, W*C) with the same W, C the params were folded
    for. A model that keeps activations in this lane-dense form pays zero layout
    overhead around this kernel."""
    A, b1t, Bexp, b2 = params
    N, H, WC = x_flat.shape
    Wmid = A.shape[2]
    if A.shape[1] != WC:
        raise ValueError("params were folded for a different (W, C)")

    tH = _choose_tile_h(H, WC, x_flat.dtype, N)
    nH = H // tH
    halo = _build_halo(x_flat, tH)

    itemsize = jnp.dtype(x_flat.dtype).itemsize
    flops = int(N * H * (2 * 3 * WC * Wmid + 2 * Wmid * WC))
    transcendentals = int(N * H * WC)                       # sigmoid lanes
    bytes_accessed = int(2 * N * H * WC * itemsize + halo.size * itemsize
                         + (A.size + b1t.size + Bexp.size) * 4)

    grid_spec = pltpu.PrefetchScalarGridSpec(
        num_scalar_prefetch=0,
        grid=(N, nH),
        in_specs=[
            pl.BlockSpec((1, tH, WC), lambda n, h: (n, h, 0)),       # x rows
            pl.BlockSpec((1, 1, 2, WC), lambda n, h: (n, h, 0, 0)),  # halo rows
            pl.BlockSpec((3, WC, Wmid), lambda n, h: (0, 0, 0)),     # A (resident)
            pl.BlockSpec((1, Wmid), lambda n, h: (0, 0)),            # b1 tiled
            pl.BlockSpec((Wmid, WC), lambda n, h: (0, 0)),           # Bexp
            pl.BlockSpec(memory_space=pltpu.MemorySpace.SMEM),       # b2 scalar
        ],
        out_specs=pl.BlockSpec((1, tH, WC), lambda n, h: (n, h, 0)),
    )

    return pl.pallas_call(
        _pa_kernel,
        out_shape=jax.ShapeDtypeStruct((N, H, WC), x_flat.dtype),
        grid_spec=grid_spec,
        compiler_params=pltpu.CompilerParams(
            dimension_semantics=("parallel", "parallel"),
            vmem_limit_bytes=32 * 1024 * 1024),
        cost_estimate=pl.CostEstimate(flops=flops,
                                      transcendentals=transcendentals,
                                      bytes_accessed=bytes_accessed),
    )(x_flat, halo, A, b1t, Bexp, b2)


def pa_layer_nhwc(x_nhwc, params):
    """NHWC adapter: only a (W,C)->(W*C) minor-dim reshape at the boundary."""
    N, H, W, C = x_nhwc.shape
    out = pa_layer_flat(x_nhwc.reshape(N, H, W * C), params)
    return out.reshape(N, H, W, C)


def pa_layer_nchw(x_nchw, params):
    """PyTorch-layout glue only; a real NHWC model should not pay these
    transposes (kept for parity with the nn.Module interface)."""
    x_nhwc = jnp.transpose(x_nchw, (0, 2, 3, 1))
    return jnp.transpose(pa_layer_nhwc(x_nhwc, params), (0, 3, 1, 2))


# ----------------------------------------------------------------------------
# Pure-JAX reference (matches the PyTorch module) for verification
# ----------------------------------------------------------------------------
def _reference_nhwc(x, conv1_w, conv1_b, conv2_w, conv2_b):
    mid = conv1_w.shape[0]
    w1_hwio = jnp.transpose(conv1_w, (2, 3, 1, 0)).astype(jnp.float32)
    y = lax.conv_general_dilated(x.astype(jnp.float32), w1_hwio, (1, 1),
                                 ((1, 1), (1, 1)),
                                 dimension_numbers=("NHWC", "HWIO", "NHWC"))
    y = jnp.maximum(y + conv1_b.reshape(1, 1, 1, mid).astype(jnp.float32), 0.0)
    w2_hwio = jnp.transpose(conv2_w, (2, 3, 1, 0)).astype(jnp.float32)
    y = lax.conv_general_dilated(y, w2_hwio, (1, 1), ((0, 0), (0, 0)),
                                 dimension_numbers=("NHWC", "HWIO", "NHWC"))
    y = jax.nn.sigmoid(y + conv2_b.reshape(1, 1, 1, 1).astype(jnp.float32))
    return (x.astype(jnp.float32) * y).astype(x.dtype)


if __name__ == "__main__":
    N, C, H, W = 2, 16, 16, 16          # channel=16 -> hidden = channel // 8 = 2
    mid = C // 8

    key = jax.random.PRNGKey(0)
    kx, kw1, kb1, kw2, kb2 = jax.random.split(key, 5)

    x_nhwc = jax.random.normal(kx, (N, H, W, C), dtype=jnp.float32)
    conv1_w = jax.random.normal(kw1, (mid, C, 3, 3), dtype=jnp.float32) * 0.1
    conv1_b = jax.random.normal(kb1, (mid,), dtype=jnp.float32) * 0.1
    conv2_w = jax.random.normal(kw2, (1, mid, 1, 1), dtype=jnp.float32) * 0.1
    conv2_b = jax.random.normal(kb2, (1,), dtype=jnp.float32) * 0.1

    params = fold_pa_params(conv1_w, conv1_b, conv2_w, conv2_b, width=W)

    # Primary (layout-friendly) path: NHWC in, NHWC out.
    out = jax.block_until_ready(jax.jit(pa_layer_nhwc)(x_nhwc, params))
    ref = _reference_nhwc(x_nhwc, conv1_w, conv1_b, conv2_w, conv2_b)
    assert out.shape == (N, H, W, C)
    assert jnp.allclose(out, ref, atol=1e-4, rtol=1e-4), "f32 NHWC mismatch"

    # PyTorch-layout adapter parity check (boundary glue only).
    x_nchw = jnp.transpose(x_nhwc, (0, 3, 1, 2))
    out_nchw = jax.block_until_ready(jax.jit(pa_layer_nchw)(x_nchw, params))
    assert jnp.allclose(out_nchw, jnp.transpose(ref, (0, 3, 1, 2)),
                        atol=1e-4, rtol=1e-4), "NCHW adapter mismatch"

    # bf16 activation streaming (halves HBM traffic on v6e/v7x); f32 math inside.
    x_bf16 = x_nhwc.astype(jnp.bfloat16)
    out_bf16 = jax.block_until_ready(jax.jit(pa_layer_nhwc)(x_bf16, params))
    ref_bf16 = _reference_nhwc(x_bf16, conv1_w, conv1_b, conv2_w, conv2_b)
    assert jnp.allclose(out_bf16.astype(jnp.float32), ref_bf16.astype(jnp.float32),
                        atol=5e-2, rtol=5e-2), "bf16 mismatch"

    print("KERNEL_OK")
</pallas_src>

<mosaic_0001>
module attributes {stable_mosaic.version = 11 : i64} {
  func.func @_pa_kernel(%arg0: i32, %arg1: i32, %arg2: memref<1x16x256xf32, #tpu.memory_space<vmem>>, %arg3: memref<1x1x2x256xf32, #tpu.memory_space<vmem>>, %arg4: memref<3x256x32xf32, #tpu.memory_space<vmem>>, %arg5: memref<1x32xf32, #tpu.memory_space<vmem>>, %arg6: memref<32x256xf32, #tpu.memory_space<vmem>>, %arg7: memref<1xf32, #tpu.memory_space<smem>>, %arg8: memref<1x16x256xf32, #tpu.memory_space<vmem>>) attributes {dimension_semantics = [#tpu.dimension_semantics<parallel>, #tpu.dimension_semantics<parallel>], iteration_bounds = array<i64: 2, 1>, scalar_prefetch = 0 : i64, scratch_operands = 0 : i64, tpu.core_type = #tpu.core_type<tc>, window_params = [{transform_indices = @transform_0, window_bounds = array<i64: 1, 16, 256>}, {transform_indices = @transform_1, window_bounds = array<i64: 1, 1, 2, 256>}, {pipeline_mode = #tpu.pipeline_mode<synchronous>, transform_indices = @transform_2, window_bounds = array<i64: 3, 256, 32>}, {pipeline_mode = #tpu.pipeline_mode<synchronous>, transform_indices = @transform_3, window_bounds = array<i64: 1, 32>}, {pipeline_mode = #tpu.pipeline_mode<synchronous>, transform_indices = @transform_4, window_bounds = array<i64: 32, 256>}, {transform_indices = @transform_5, window_bounds = array<i64: 1>}, {transform_indices = @transform_6, window_bounds = array<i64: 1, 16, 256>}]} {
    %c0 = arith.constant 0 : index
    %c0_0 = arith.constant 0 : index
    %c0_1 = arith.constant 0 : index
    %0 = vector.load %arg2[%c0, %c0_0, %c0_1] : memref<1x16x256xf32, #tpu.memory_space<vmem>>, vector<1x16x256xf32>
    %1 = vector.shape_cast %0 : vector<1x16x256xf32> to vector<16x256xf32>
    %c0_2 = arith.constant 0 : index
    %c0_3 = arith.constant 0 : index
    %c0_4 = arith.constant 0 : index
    %c0_5 = arith.constant 0 : index
    %2 = vector.load %arg3[%c0_2, %c0_3, %c0_4, %c0_5] : memref<1x1x2x256xf32, #tpu.memory_space<vmem>>, vector<1x1x2x256xf32>
    %3 = vector.shape_cast %2 : vector<1x1x2x256xf32> to vector<2x256xf32>
    %4 = vector.extract_strided_slice %3 {offsets = [0, 0], sizes = [1, 256], strides = [1, 1]} : vector<2x256xf32> to vector<1x256xf32>
    %5 = vector.extract_strided_slice %3 {offsets = [1, 0], sizes = [1, 256], strides = [1, 1]} : vector<2x256xf32> to vector<1x256xf32>
    %6 = tpu.concatenate %4, %1, %5 in 0 : vector<1x256xf32>, vector<16x256xf32>, vector<1x256xf32> -> vector<18x256xf32>
    %cst = arith.constant 0.000000e+00 : f32
    %7 = vector.broadcast %cst : f32 to vector<16x32xf32>
    %c0_6 = arith.constant 0 : index
    %c0_7 = arith.constant 0 : index
    %c0_8 = arith.constant 0 : index
    %8 = vector.load %arg4[%c0_6, %c0_7, %c0_8] : memref<3x256x32xf32, #tpu.memory_space<vmem>>, vector<1x256x32xf32>
    %9 = vector.shape_cast %8 : vector<1x256x32xf32> to vector<256x32xf32>
    %cst_9 = arith.constant dense<0.000000e+00> : vector<18x32xf32>
    %10 = tpu.matmul %6, %9, %cst_9 {dimension_numbers = #tpu.dot_dimension_numbers<[1], [0], [0], [1], [0, 0, 1, 1], [], []>} : vector<18x256xf32>, vector<256x32xf32>, vector<18x32xf32> -> vector<18x32xf32>
    %11 = vector.extract_strided_slice %10 {offsets = [0, 0], sizes = [16, 32], strides = [1, 1]} : vector<18x32xf32> to vector<16x32xf32>
    %12 = arith.addf %7, %11 : vector<16x32xf32>
    %c1 = arith.constant 1 : index
    %c0_10 = arith.constant 0 : index
    %c0_11 = arith.constant 0 : index
    %13 = vector.load %arg4[%c1, %c0_10, %c0_11] : memref<3x256x32xf32, #tpu.memory_space<vmem>>, vector<1x256x32xf32>
    %14 = vector.shape_cast %13 : vector<1x256x32xf32> to vector<256x32xf32>
    %cst_12 = arith.constant dense<0.000000e+00> : vector<18x32xf32>
    %15 = tpu.matmul %6, %14, %cst_12 {dimension_numbers = #tpu.dot_dimension_numbers<[1], [0], [0], [1], [0, 0, 1, 1], [], []>} : vector<18x256xf32>, vector<256x32xf32>, vector<18x32xf32> -> vector<18x32xf32>
    %16 = vector.extract_strided_slice %15 {offsets = [1, 0], sizes = [16, 32], strides = [1, 1]} : vector<18x32xf32> to vector<16x32xf32>
    %17 = arith.addf %12, %16 : vector<16x32xf32>
    %c2 = arith.constant 2 : index
    %c0_13 = arith.constant 0 : index
    %c0_14 = arith.constant 0 : index
    %18 = vector.load %arg4[%c2, %c0_13, %c0_14] : memref<3x256x32xf32, #tpu.memory_space<vmem>>, vector<1x256x32xf32>
    %19 = vector.shape_cast %18 : vector<1x256x32xf32> to vector<256x32xf32>
    %cst_15 = arith.constant dense<0.000000e+00> : vector<18x32xf32>
    %20 = tpu.matmul %6, %19, %cst_15 {dimension_numbers = #tpu.dot_dimension_numbers<[1], [0], [0], [1], [0, 0, 1, 1], [], []>} : vector<18x256xf32>, vector<256x32xf32>, vector<18x32xf32> -> vector<18x32xf32>
    %21 = vector.extract_strided_slice %20 {offsets = [2, 0], sizes = [16, 32], strides = [1, 1]} : vector<18x32xf32> to vector<16x32xf32>
    %22 = arith.addf %17, %21 : vector<16x32xf32>
    %c0_16 = arith.constant 0 : index
    %c0_17 = arith.constant 0 : index
    %23 = vector.load %arg5[%c0_16, %c0_17] : memref<1x32xf32, #tpu.memory_space<vmem>>, vector<1x32xf32>
    %24 = vector.broadcast %23 : vector<1x32xf32> to vector<16x32xf32>
    %25 = arith.addf %22, %24 : vector<16x32xf32>
    %cst_18 = arith.constant 0.000000e+00 : f32
    %26 = vector.broadcast %cst_18 : f32 to vector<16x32xf32>
    %27 = arith.maximumf %25, %26 : vector<16x32xf32>
    %c0_19 = arith.constant 0 : index
    %c0_20 = arith.constant 0 : index
    %28 = vector.load %arg6[%c0_19, %c0_20] : memref<32x256xf32, #tpu.memory_space<vmem>>, vector<32x256xf32>
    %cst_21 = arith.constant dense<0.000000e+00> : vector<16x256xf32>
    %29 = tpu.matmul %27, %28, %cst_21 {dimension_numbers = #tpu.dot_dimension_numbers<[1], [0], [0], [1], [0, 0, 1, 1], [], []>} : vector<16x32xf32>, vector<32x256xf32>, vector<16x256xf32> -> vector<16x256xf32>
    %c0_22 = arith.constant 0 : index
    %30 = memref.load %arg7[%c0_22] : memref<1xf32, #tpu.memory_space<smem>>
    %31 = vector.broadcast %30 : f32 to vector<16x256xf32>
    %32 = arith.addf %29, %31 : vector<16x256xf32>
    %33 = arith.negf %32 : vector<16x256xf32>
    %34 = math.exp %33 : vector<16x256xf32>
    %cst_23 = arith.constant 1.000000e+00 : f32
    %35 = vector.broadcast %cst_23 : f32 to vector<16x256xf32>
    %36 = arith.addf %35, %34 : vector<16x256xf32>
    %37 = arith.divf %35, %36 : vector<16x256xf32>
    %38 = arith.mulf %1, %37 : vector<16x256xf32>
    %c0_24 = arith.constant 0 : index
    %c0_25 = arith.constant 0 : index
    %c0_26 = arith.constant 0 : index
    %39 = vector.load %arg8[%c0_24, %c0_25, %c0_26] : memref<1x16x256xf32, #tpu.memory_space<vmem>>, vector<1x16x256xf32>
    %40 = vector.shape_cast %39 : vector<1x16x256xf32> to vector<16x256xf32>
    %41 = vector.shape_cast %38 : vector<16x256xf32> to vector<1x16x256xf32>
    tpu.vector_store %arg8[%c0_24, %c0_25, %c0_26], %41 {strides = array<i32>} : memref<1x16x256xf32, #tpu.memory_space<vmem>>, vector<1x16x256xf32>,
    return
  }
  func.func @transform_0(%arg0: i32, %arg1: i32) -> (i32, i32, i32) {
    %c0_i32 = arith.constant 0 : i32
    %c0_i32_0 = arith.constant 0 : i32
    return %arg0, %arg1, %c0_i32 : i32, i32, i32
  }
  func.func @transform_1(%arg0: i32, %arg1: i32) -> (i32, i32, i32, i32) {
    %c0_i32 = arith.constant 0 : i32
    %c0_i32_0 = arith.constant 0 : i32
    %c0_i32_1 = arith.constant 0 : i32
    return %arg0, %arg1, %c0_i32, %c0_i32_0 : i32, i32, i32, i32
  }
  func.func @transform_2(%arg0: i32, %arg1: i32) -> (i32, i32, i32) {
    %c0_i32 = arith.constant 0 : i32
    %c0_i32_0 = arith.constant 0 : i32
    %c0_i32_1 = arith.constant 0 : i32
    %c0_i32_2 = arith.constant 0 : i32
    return %c0_i32, %c0_i32_0, %c0_i32_1 : i32, i32, i32
  }
  func.func @transform_3(%arg0: i32, %arg1: i32) -> (i32, i32) {
    %c0_i32 = arith.constant 0 : i32
    %c0_i32_0 = arith.constant 0 : i32
    %c0_i32_1 = arith.constant 0 : i32
    return %c0_i32, %c0_i32_0 : i32, i32
  }
  func.func @transform_4(%arg0: i32, %arg1: i32) -> (i32, i32) {
    %c0_i32 = arith.constant 0 : i32
    %c0_i32_0 = arith.constant 0 : i32
    %c0_i32_1 = arith.constant 0 : i32
    return %c0_i32, %c0_i32_0 : i32, i32
  }
  func.func @transform_5(%arg0: i32, %arg1: i32) -> i32 {
    %c0_i32 = arith.constant 0 : i32
    %c0_i32_0 = arith.constant 0 : i32
    return %c0_i32 : i32
  }
  func.func @transform_6(%arg0: i32, %arg1: i32) -> (i32, i32, i32) {
    %c0_i32 = arith.constant 0 : i32
    %c0_i32_0 = arith.constant 0 : i32
    return %arg0, %arg1, %c0_i32 : i32, i32, i32
  }
}

</mosaic_0001>

<llo_original>
// kernel: pa_layer_nhwc.1
$region0: #{pa_layer_nhwc.1}
  #allocation0 [shape = 'u32[]', space=smem, size = 0x4, offset = 0x4, fixed_abs, tag = 'smem constant byte address 0x4 - core index']
  #allocation1 [shape = 'u32[144,128]{1,0:T(1,128)}', space=vmem, size = 0x12000, scoped, tag = 'internal scratch']
  #allocation2 [shape = 'f32[1]{0:T(128)S(6)}', space=smem, size = 0x200, scoped, tag = 'scoped memory for pa_layer_nhwc.1']
  %s0 = inlined_call_operand.vmem [shape: f32[2,16,256], index: 0, kind: input, shape index: {}]
  %s1 = inlined_call_operand.vmem [shape: f32[2,1,2,256], index: 1, kind: input, shape index: {}]
  %s2 = inlined_call_operand.vmem [shape: f32[3,256,32], index: 2, kind: input, shape index: {}]
  %s3 = inlined_call_operand.vmem [shape: f32[1,32], index: 3, kind: input, shape index: {}]
  %s4 = inlined_call_operand.vmem [shape: f32[32,256], index: 4, kind: input, shape index: {}]
  %s5 = inlined_call_operand.<no memory space> [shape: f32[1], index: 5, kind: input, shape index: {}]
  %s6 = inlined_call_operand.vmem [shape: f32[2,16,256], index: 6, kind: output, shape index: {}]
  %s7 = sld [smem:[#allocation0]]
  $region57: #{pa_layer_nhwc.1} parent=0
    _
  %s9 = ssub.s32 1, %s7
  %s10 = scalar_select 0, %s9, %s7
  %11 = sst [smem:[#allocation2]] %s5
  loop: start=0, step=1, limit=4
  $region2: #{pa_layer_nhwc.1} parent=0 // loop_pre_header
    _
  $region3: #{pa_layer_nhwc.1} parent=0 // loop_header
    %s13 = sphi 0, %s17
    %p14 = scmp.ge.s32.totalorder %s13, 4
    %s20 = sphi 0, %s32
    %s21 = sphi 0, %s28
    %s22 = sphi 0, %s20
    %s23 = sphi 0, %s21
    %s24 = sphi 0, %s22
    %s25 = sphi 0, %s23
    %s37 = sphi 0, %s39
    %s40 = sphi 0, %s37
    %s41 = sphi 0, %s40
    %s57 = sphi 0, %s41
    %s65 = sphi 0, %s67
    %s68 = sphi 0, %s65
    %s69 = sphi 0, %s68
    %s85 = sphi 0, %s69
    %s89 = sphi 0, %s89
    %s91 = sphi 0, %s89
    %s92 = sphi 0, %s91
    %s106 = sphi 0, %s92
    %s110 = sphi 0, %s110
    %s112 = sphi 0, %s110
    %s113 = sphi 0, %s112
    %s127 = sphi 0, %s113
    %s131 = sphi 0, %s131
    %s133 = sphi 0, %s131
    %s134 = sphi 0, %s133
    %s148 = sphi 0, %s134
    %s152 = sphi 0, %s152
    %s154 = sphi 0, %s152
    %s155 = sphi 0, %s154
    %s169 = sphi 0, %s155
    %s177 = sphi 0, %s179
    %s180 = sphi 0, %s177
    %s181 = sphi 0, %s180
    %s197 = sphi 0, %s181
  $region4: #{pa_layer_nhwc.1} parent=0 // loop_header_branch
    %16 = sbr.rel (%p14) target = $region8
  $region5: #{pa_layer_nhwc.1} parent=0 // loop_body
    %s18 = ssub.s32 %s13, 1
    %s19 = ssub.s32 %s13, 2
    %s26 = sadd.s32 1, %s21
    %p27 = scmp.ge.s32.totalorder %s26, 1
    %s28 = scalar_select %p27, 0, %s26
    %s29 = sadd.s32 1, %s20
    %s30 = scalar_select %p27, %s29, %s20
    %p31 = scmp.ge.s32.totalorder %s30, 2
    %s32 = scalar_select %p31, 0, %s30
    %s33 = ssub.s32 %s20, %s32
    %s34 = ssub.s32 %s21, %s28
    %s35 = sor.u32 %s33, %s34
    %p36 = scmp.eq.s32.totalorder %s35, 0
    %s38 = sadd.s32 %s37, 1
    %s39 = scalar_select %p36, %s37, %s38
    %p42 = pneg %p36
    %p43 = scmp.eq.s32.totalorder %s13, 1
    %p44 = por %p42, %p43
    %p45 = scmp.ne.s32.totalorder %s37, %s40
    %p46 = scmp.eq.s32.totalorder %s13, 0
    %p47 = por %p45, %p46
    %p48 = scmp.ne.s32.totalorder %s37, %s40
    %p49 = scmp.eq.s32.totalorder %s18, 1
    %p50 = por %p48, %p49
    %p51 = scmp.ne.s32.totalorder %s40, %s41
    %p52 = scmp.eq.s32.totalorder %s18, 0
    %p53 = por %p51, %p52
    %p54 = scmp.ne.s32.totalorder %s40, %s41
    %p55 = scmp.eq.s32.totalorder %s19, 1
    %p56 = por %p54, %p55
    %p58 = scmp.ne.s32.totalorder %s41, %s57
    %p59 = scmp.eq.s32.totalorder %s19, 0
    %p60 = por %p58, %p59
    %s61 = ssub.s32 %s20, %s32
    %s62 = ssub.s32 %s21, %s28
    %s63 = sor.u32 %s61, %s62
    %p64 = scmp.eq.s32.totalorder %s63, 0
    %s66 = sadd.s32 %s65, 1
    %s67 = scalar_select %p64, %s65, %s66
    %p70 = pneg %p64
    %p71 = scmp.eq.s32.totalorder %s13, 1
    %p72 = por %p70, %p71
    %p73 = scmp.ne.s32.totalorder %s65, %s68
    %p74 = scmp.eq.s32.totalorder %s13, 0
    %p75 = por %p73, %p74
    %p76 = scmp.ne.s32.totalorder %s65, %s68
    %p77 = scmp.eq.s32.totalorder %s18, 1
    %p78 = por %p76, %p77
    %p79 = scmp.ne.s32.totalorder %s68, %s69
    %p80 = scmp.eq.s32.totalorder %s18, 0
    %p81 = por %p79, %p80
    %p82 = scmp.ne.s32.totalorder %s68, %s69
    %p83 = scmp.eq.s32.totalorder %s19, 1
    %p84 = por %p82, %p83
    %p86 = scmp.ne.s32.totalorder %s69, %s85
    %p87 = scmp.eq.s32.totalorder %s19, 0
    %p88 = por %p86, %p87
    %s90 = sadd.s32 %s89, 1
    %p93 = scmp.eq.s32.totalorder %s13, 1
    %p94 = scmp.ne.s32.totalorder %s89, %s91
    %p95 = scmp.eq.s32.totalorder %s13, 0
    %p96 = por %p94, %p95
    %p97 = scmp.ne.s32.totalorder %s89, %s91
    %p98 = scmp.eq.s32.totalorder %s18, 1
    %p99 = por %p97, %p98
    %p100 = scmp.ne.s32.totalorder %s91, %s92
    %p101 = scmp.eq.s32.totalorder %s18, 0
    %p102 = por %p100, %p101
    %p103 = scmp.ne.s32.totalorder %s91, %s92
    %p104 = scmp.eq.s32.totalorder %s19, 1
    %p105 = por %p103, %p104
    %p107 = scmp.ne.s32.totalorder %s92, %s106
    %p108 = scmp.eq.s32.totalorder %s19, 0
    %p109 = por %p107, %p108
    %s111 = sadd.s32 %s110, 1
    %p114 = scmp.eq.s32.totalorder %s13, 1
    %p115 = scmp.ne.s32.totalorder %s110, %s112
    %p116 = scmp.eq.s32.totalorder %s13, 0
    %p117 = por %p115, %p116
    %p118 = scmp.ne.s32.totalorder %s110, %s112
    %p119 = scmp.eq.s32.totalorder %s18, 1
    %p120 = por %p118, %p119
    %p121 = scmp.ne.s32.totalorder %s112, %s113
    %p122 = scmp.eq.s32.totalorder %s18, 0
    %p123 = por %p121, %p122
    %p124 = scmp.ne.s32.totalorder %s112, %s113
    %p125 = scmp.eq.s32.totalorder %s19, 1
    %p126 = por %p124, %p125
    %p128 = scmp.ne.s32.totalorder %s113, %s127
    %p129 = scmp.eq.s32.totalorder %s19, 0
    %p130 = por %p128, %p129
    %s132 = sadd.s32 %s131, 1
    %p135 = scmp.eq.s32.totalorder %s13, 1
    %p136 = scmp.ne.s32.totalorder %s131, %s133
    %p137 = scmp.eq.s32.totalorder %s13, 0
    %p138 = por %p136, %p137
    %p139 = scmp.ne.s32.totalorder %s131, %s133
    %p140 = scmp.eq.s32.totalorder %s18, 1
    %p141 = por %p139, %p140
    %p142 = scmp.ne.s32.totalorder %s133, %s134
    %p143 = scmp.eq.s32.totalorder %s18, 0
    %p144 = por %p142, %p143
    %p145 = scmp.ne.s32.totalorder %s133, %s134
    %p146 = scmp.eq.s32.totalorder %s19, 1
    %p147 = por %p145, %p146
    %p149 = scmp.ne.s32.totalorder %s134, %s148
    %p150 = scmp.eq.s32.totalorder %s19, 0
    %p151 = por %p149, %p150
    %s153 = sadd.s32 %s152, 1
    %p156 = scmp.eq.s32.totalorder %s13, 1
    %p157 = scmp.ne.s32.totalorder %s152, %s154
    %p158 = scmp.eq.s32.totalorder %s13, 0
    %p159 = por %p157, %p158
    %p160 = scmp.ne.s32.totalorder %s152, %s154
    %p161 = scmp.eq.s32.totalorder %s18, 1
    %p162 = por %p160, %p161
    %p163 = scmp.ne.s32.totalorder %s154, %s155
    %p164 = scmp.eq.s32.totalorder %s18, 0
    %p165 = por %p163, %p164
    %p166 = scmp.ne.s32.totalorder %s154, %s155
    %p167 = scmp.eq.s32.totalorder %s19, 1
    %p168 = por %p166, %p167
    %p170 = scmp.ne.s32.totalorder %s155, %s169
    %p171 = scmp.eq.s32.totalorder %s19, 0
    %p172 = por %p170, %p171
    %s173 = ssub.s32 %s20, %s32
    %s174 = ssub.s32 %s21, %s28
    %s175 = sor.u32 %s173, %s174
    %p176 = scmp.eq.s32.totalorder %s175, 0
    %s178 = sadd.s32 %s177, 1
    %s179 = scalar_select %p176, %s177, %s178
    %p182 = pneg %p176
    %p183 = scmp.eq.s32.totalorder %s13, 1
    %p184 = por %p182, %p183
    %p185 = scmp.ne.s32.totalorder %s177, %s180
    %p186 = scmp.eq.s32.totalorder %s13, 0
    %p187 = por %p185, %p186
    %p188 = scmp.ne.s32.totalorder %s177, %s180
    %p189 = scmp.eq.s32.totalorder %s18, 1
    %p190 = por %p188, %p189
    %p191 = scmp.ne.s32.totalorder %s180, %s181
    %p192 = scmp.eq.s32.totalorder %s18, 0
    %p193 = por %p191, %p192
    %p194 = scmp.ne.s32.totalorder %s180, %s181
    %p195 = scmp.eq.s32.totalorder %s19, 1
    %p196 = por %p194, %p195
    %p198 = scmp.ne.s32.totalorder %s181, %s197
    %p199 = scmp.eq.s32.totalorder %s19, 0
    %p200 = por %p198, %p199
    %p201 = scmp.le.s32.totalorder 1, %s13
    %p202 = scmp.lt.s32.totalorder %s13, 3
    %p203 = pnand %p201, %p202
    %p204 = pneg %p203
    // Predicated region
    $region9: #{pa_layer_nhwc.1} parent=5 // pred_check
      _
    $region10: #{pa_layer_nhwc.1} parent=5 // pred_check_branch
      %206 = sbr.rel (%p203) target = $region12
    $region11: #{pa_layer_nhwc.1} parent=5 // pred_region
      %s207 = ssub.s32 %s13, 1
      // Predicated region
      $region13: #{pa_layer_nhwc.1} parent=11 // pred_check
        %p208 = pneg %p102
      $region14: #{pa_layer_nhwc.1} parent=11 // pred_check_branch
        %210 = sbr.rel (%p208) target = $region16
      $region15: #{pa_layer_nhwc.1} parent=11 // pred_region
        _
      $region16: #{pa_layer_nhwc.1} parent=11 // pred_fallthru
        _
      // Predicated region
      $region17: #{pa_layer_nhwc.1} parent=11 // pred_check
        %p211 = pneg %p123
      $region18: #{pa_layer_nhwc.1} parent=11 // pred_check_branch
        %213 = sbr.rel (%p211) target = $region20
      $region19: #{pa_layer_nhwc.1} parent=11 // pred_region
        _
      $region20: #{pa_layer_nhwc.1} parent=11 // pred_fallthru
        _
      // Predicated region
      $region21: #{pa_layer_nhwc.1} parent=11 // pred_check
        %p214 = pneg %p144
      $region22: #{pa_layer_nhwc.1} parent=11 // pred_check_branch
        %216 = sbr.rel (%p214) target = $region24
      $region23: #{pa_layer_nhwc.1} parent=11 // pred_region
        _
      $region24: #{pa_layer_nhwc.1} parent=11 // pred_fallthru
        _
      // Predicated region
      $region25: #{pa_layer_nhwc.1} parent=11 // pred_check
        %p217 = pneg %p165
      $region26: #{pa_layer_nhwc.1} parent=11 // pred_check_branch
        %219 = sbr.rel (%p217) target = $region28
      $region27: #{pa_layer_nhwc.1} parent=11 // pred_region
        _
      $region28: #{pa_layer_nhwc.1} parent=11 // pred_fallthru
        _
    $region12: #{pa_layer_nhwc.1} parent=5 // pred_fallthru
      _
    %p220 = scmp.lt.s32.totalorder %s13, 2
    // Predicated region
    $region29: #{pa_layer_nhwc.1} parent=5 // pred_check
      %p221 = pneg %p220
    $region30: #{pa_layer_nhwc.1} parent=5 // pred_check_branch
      %223 = sbr.rel (%p221) target = $region32
    $region31: #{pa_layer_nhwc.1} parent=5 // pred_region
      // Predicated region
      $region33: #{pa_layer_nhwc.1} parent=31 // pred_check
        %p224 = pneg %p47
      $region34: #{pa_layer_nhwc.1} parent=31 // pred_check_branch
        %226 = sbr.rel (%p224) target = $region36
      $region35: #{pa_layer_nhwc.1} parent=31 // pred_region
        %s227 = smul.u32 2, %s21
        %p228 = scmp.lt.s32.totalorder %s20, 1
        %s229 = scalar_select %p228, %s20, 1
        %p230 = scmp.lt.s32.totalorder %s227, 1
        %s231 = scalar_select %p230, %s227, 1
        %s232 = smul.addr %s231, 2
        %s233 = smul.addr %s229, 4
        %s234 = sadd.s32 %s232, %s233
        %s235 = smul.addr %s234, 8
        %s236 = scalar_lea.vmem %s0, %s235
        %s237 = smul.u32 2, %s21
      $region36: #{pa_layer_nhwc.1} parent=31 // pred_fallthru
        _
      // Predicated region
      $region37: #{pa_layer_nhwc.1} parent=31 // pred_check
        %p238 = pneg %p75
      $region38: #{pa_layer_nhwc.1} parent=31 // pred_check_branch
        %240 = sbr.rel (%p238) target = $region40
      $region39: #{pa_layer_nhwc.1} parent=31 // pred_region
        %p241 = scmp.lt.s32.totalorder %s20, 1
        %s242 = scalar_select %p241, %s20, 1
        %p243 = scmp.lt.s32.totalorder %s21, 0
        %s244 = scalar_select %p243, %s21, 0
        %s245 = smul.addr %s244, 2
        %s246 = smul.addr %s242, 2
        %s247 = sadd.s32 %s245, %s246
        %s248 = smul.addr %s247, 2
        %s249 = scalar_lea.vmem %s1, %s248
      $region40: #{pa_layer_nhwc.1} parent=31 // pred_fallthru
        _
    $region32: #{pa_layer_nhwc.1} parent=5 // pred_fallthru
      _
    %p250 = scmp.le.s32.totalorder 1, %s13
    %p251 = scmp.lt.s32.totalorder %s13, 3
    %p252 = pnand %p250, %p251
    %p253 = pneg %p252
    // Predicated region
    $region41: #{pa_layer_nhwc.1} parent=5 // pred_check
      _
    $region42: #{pa_layer_nhwc.1} parent=5 // pred_check_branch
      %255 = sbr.rel (%p252) target = $region44
    $region43: #{pa_layer_nhwc.1} parent=5 // pred_region
      %s256 = ssub.s32 %s13, 1
      %s257 = smul.u32 2, %s23
      %p258 = scmp.lt.s32.totalorder %s22, 1
      %s259 = scalar_select %p258, %s22, 1
      %p260 = scmp.lt.s32.totalorder %s257, 1
      %s261 = scalar_select %p260, %s257, 1
      %s262 = smul.addr %s261, 2
      %s263 = smul.addr %s259, 4
      %s264 = sadd.s32 %s262, %s263
      %s265 = smul.addr %s264, 8
      %s266 = scalar_lea.vmem %s0, %s265
      %p267 = pneg %p53
      %p268 = pneg %p50
      %p269 = scmp.lt.s32.totalorder %s22, 1
      %s270 = scalar_select %p269, %s22, 1
      %p271 = scmp.lt.s32.totalorder %s23, 0
      %s272 = scalar_select %p271, %s23, 0
      %s273 = smul.addr %s272, 2
      %s274 = smul.addr %s270, 2
      %s275 = sadd.s32 %s273, %s274
      %s276 = smul.addr %s275, 2
      %s277 = scalar_lea.vmem %s1, %s276
      %p278 = pneg %p81
      %p279 = pneg %p78
      %p280 = pneg %p102
      %p281 = pneg %p99
      %p282 = pneg %p123
      %p283 = pneg %p120
      %p284 = pneg %p144
      %p285 = pneg %p141
      %p286 = pneg %p165
      %p287 = pneg %p162
      %p288 = pneg %p193
      %p289 = pneg %p190
      %s290 = smul.u32 2, %s23
      %p291 = scmp.lt.s32.totalorder %s22, 1
      %s292 = scalar_select %p291, %s22, 1
      %p293 = scmp.lt.s32.totalorder %s290, 1
      %s294 = scalar_select %p293, %s290, 1
      %s295 = smul.addr %s294, 2
      %s296 = smul.addr %s292, 4
      %s297 = sadd.s32 %s295, %s296
      %s298 = smul.addr %s297, 8
      %s299 = scalar_lea.vmem %s6, %s298
      %s300 = smul.u32 2, %s23
      %p301 = scmp.lt.s32.totalorder %s22, 1
      %s302 = scalar_select %p301, %s22, 1
      %p303 = scmp.lt.s32.totalorder %s300, 1
      %s304 = scalar_select %p303, %s300, 1
      %s305 = smul.addr %s304, 2
      %s306 = smul.addr %s302, 4
      %s307 = sadd.s32 %s305, %s306
      %s308 = smul.addr %s307, 8
      %s309 = scalar_lea.vmem %s0, %s308
      %s310 = smul.u32 2, %s23
      %p311 = scmp.lt.s32.totalorder %s22, 1
      %s312 = scalar_select %p311, %s22, 1
      %p313 = scmp.lt.s32.totalorder %s23, 0
      %s314 = scalar_select %p313, %s23, 0
      %s315 = smul.addr %s314, 2
      %s316 = smul.addr %s312, 2
      %s317 = sadd.s32 %s315, %s316
      %s318 = smul.addr %s317, 2
      %s319 = scalar_lea.vmem %s1, %s318
      %s320 = smul.u32 2, %s23
      %p321 = scmp.lt.s32.totalorder %s22, 1
      %s322 = scalar_select %p321, %s22, 1
      %p323 = scmp.lt.s32.totalorder %s320, 1
      %s324 = scalar_select %p323, %s320, 1
      %s325 = smul.addr %s324, 2
      %s326 = smul.addr %s322, 4
      %s327 = sadd.s32 %s325, %s326
      %s328 = smul.addr %s327, 8
      %s329 = scalar_lea.vmem %s6, %s328
      %s330 = smul.u32 2, %s23
      %v331 = vld [vmem:[%s309] sm:$0xff]
      %v332 = vld [vmem:[%s309 + $0x8] sm:$0xff]
      %v333 = vld [vmem:[%s309 + $0x10] sm:$0xff]
      %v334 = vld [vmem:[%s309 + $0x18] sm:$0xff]
      %v335 = vld [vmem:[%s319] sm:$0xf]
      %v337 = vlaneseq
      %v338 = vshrl.u32 %v337, 7
      %v339 = vsub.s32 0, %v338
      %v340 = vrot.slane %v335, %v339
      %v341 = vlaneseq
      %v342 = vshrl.u32 %v341, 7
      %v343 = vsub.s32 2, %v342
      %v344 = vrot.slane %v335, %v343
      %vm351 = vcmask 1040384
      %v352 = vrot.slane %v331, 7
      %v353 = vrot.slane %v332, 7
      %v354 = vrot.slane %v333, 7
      %v355 = vsel %vm351, %v352, %v354
      %v356 = vrot.slane %v334, 7
      %v357 = vsel %vm351, %v353, %v356
      %v364 = vlaneseq
      %v365 = vshrl.u32 %v364, 7
      %v366 = vsub.s32 1, %v365
      %v367 = vrot.slane %v335, %v366
      %v368 = vlaneseq
      %v369 = vshrl.u32 %v368, 7
      %v370 = vsub.s32 3, %v369
      %v371 = vrot.slane %v335, %v370
      %v374 = vsel %vm351, %v340, %v352
      %v375 = vsel %vm351, %v344, %v353
      %v376 = vsel %vm351, %v354, %v367
      %v377 = vsel %vm351, %v356, %v371
      %v378 = vld [vmem:[%s2] sm:$0xff]
      %v379 = vld [vmem:[%s2 + $0x8] sm:$0xff]
      %v380 = vld [vmem:[%s2 + $0x10] sm:$0xff]
      %v381 = vld [vmem:[%s2 + $0x18] sm:$0xff]
      %v382 = vld [vmem:[%s2 + $0x20] sm:$0xff]
      %v383 = vld [vmem:[%s2 + $0x28] sm:$0xff]
      %v384 = vld [vmem:[%s2 + $0x30] sm:$0xff]
      %v385 = vld [vmem:[%s2 + $0x38] sm:$0xff]
      %v386 = vld [vmem:[%s2 + $0x40] sm:$0xff]
      %v387 = vld [vmem:[%s2 + $0x48] sm:$0xff]
      %v388 = vld [vmem:[%s2 + $0x50] sm:$0xff]
      %v389 = vld [vmem:[%s2 + $0x58] sm:$0xff]
      %v390 = vld [vmem:[%s2 + $0x60] sm:$0xff]
      %v391 = vld [vmem:[%s2 + $0x68] sm:$0xff]
      %v392 = vld [vmem:[%s2 + $0x70] sm:$0xff]
      %v393 = vld [vmem:[%s2 + $0x78] sm:$0xff]
      %v394 = vld [vmem:[%s2 + $0x80] sm:$0xff]
      %v395 = vld [vmem:[%s2 + $0x88] sm:$0xff]
      %v396 = vld [vmem:[%s2 + $0x90] sm:$0xff]
      %v397 = vld [vmem:[%s2 + $0x98] sm:$0xff]
      %v398 = vld [vmem:[%s2 + $0xa0] sm:$0xff]
      %v399 = vld [vmem:[%s2 + $0xa8] sm:$0xff]
      %v400 = vld [vmem:[%s2 + $0xb0] sm:$0xff]
      %v401 = vld [vmem:[%s2 + $0xb8] sm:$0xff]
      %v402 = vld [vmem:[%s2 + $0xc0] sm:$0xff]
      %v403 = vld [vmem:[%s2 + $0xc8] sm:$0xff]
      %v404 = vld [vmem:[%s2 + $0xd0] sm:$0xff]
      %v405 = vld [vmem:[%s2 + $0xd8] sm:$0xff]
      %v406 = vld [vmem:[%s2 + $0xe0] sm:$0xff]
      %v407 = vld [vmem:[%s2 + $0xe8] sm:$0xff]
      %v408 = vld [vmem:[%s2 + $0xf0] sm:$0xff]
      %v409 = vld [vmem:[%s2 + $0xf8] sm:$0xff]
      %410 = vmatprep.subr.mxu0 0.0
      %411 = vmatpush1.msra.mxu0 %v378
      %412 = vmatprep.subr.mxu0 0.0
      %413 = vmatpush1.msra.mxu0 %v379
      %414 = vmatprep.subr.mxu0 0.0
      %415 = vmatpush1.msra.mxu0 %v380
      %416 = vmatprep.subr.mxu0 0.0
      %417 = vmatpush1.msra.mxu0 %v381
      %418 = vmatprep.subr.mxu0 0.0
      %419 = vmatpush1.msra.mxu0 %v382
      %420 = vmatprep.subr.mxu0 0.0
      %421 = vmatpush1.msra.mxu0 %v383
      %422 = vmatprep.subr.mxu0 0.0
      %423 = vmatpush1.msra.mxu0 %v384
      %424 = vmatprep.subr.mxu0 0.0
      %425 = vmatpush1.msra.mxu0 %v385
      %426 = vmatprep.subr.mxu0 0.0
      %427 = vmatpush1.msra.mxu0 %v386
      %428 = vmatprep.subr.mxu0 0.0
      %429 = vmatpush1.msra.mxu0 %v387
      %430 = vmatprep.subr.mxu0 0.0
      %431 = vmatpush1.msra.mxu0 %v388
      %432 = vmatprep.subr.mxu0 0.0
      %433 = vmatpush1.msra.mxu0 %v389
      %434 = vmatprep.subr.mxu0 0.0
      %435 = vmatpush1.msra.mxu0 %v390
      %436 = vmatprep.subr.mxu0 0.0
      %437 = vmatpush1.msra.mxu0 %v391
      %438 = vmatprep.subr.mxu0 0.0
      %439 = vmatpush1.msra.mxu0 %v392
      %440 = vmatprep.subr.mxu0 0.0
      %441 = vmatpush1.msra.mxu0 %v393
      %442 = vmatprep.subr.mxu0 0.0
      %443 = vmatpush1.msra.mxu0 %v394
      %444 = vmatprep.subr.mxu0 0.0
      %445 = vmatpush1.msra.mxu0 %v395
      %446 = vmatprep.subr.mxu0 0.0
      %447 = vmatpush1.msra.mxu0 %v396
      %448 = vmatprep.subr.mxu0 0.0
      %449 = vmatpush1.msra.mxu0 %v397
      %450 = vmatprep.subr.mxu0 0.0
      %451 = vmatpush1.msra.mxu0 %v398
      %452 = vmatprep.subr.mxu0 0.0
      %453 = vmatpush1.msra.mxu0 %v399
      %454 = vmatprep.subr.mxu0 0.0
      %455 = vmatpush1.msra.mxu0 %v400
      %456 = vmatprep.subr.mxu0 0.0
      %457 = vmatpush1.msra.mxu0 %v401
      %458 = vmatprep.subr.mxu0 0.0
      %459 = vmatpush1.msra.mxu0 %v402
      %460 = vmatprep.subr.mxu0 0.0
      %461 = vmatpush1.msra.mxu0 %v403
      %462 = vmatprep.subr.mxu0 0.0
      %463 = vmatpush1.msra.mxu0 %v404
      %464 = vmatprep.subr.mxu0 0.0
      %465 = vmatpush1.msra.mxu0 %v405
      %466 = vmatprep.subr.mxu0 0.0
      %467 = vmatpush1.msra.mxu0 %v406
      %468 = vmatprep.subr.mxu0 0.0
      %469 = vmatpush1.msra.mxu0 %v407
      %470 = vmatprep.subr.mxu0 0.0
      %471 = vmatpush1.msra.mxu0 %v408
      %472 = vmatprep.subr.mxu0 0.0
      %473 = vmatpush1.msra.mxu0 %v409
      %474 = vmatprep.mubr.f32.mxu0 %v375
      %475 = vmatmul.mubr.f32.gmra.mrb[0].mxu0 %v374
      %v476 = vpop.f32.mrb[0].mxu0
      %v477 = vadd.f32 0.0, %v476
      %v478 = vpop.f32.mrb[0].mxu0
      %479 = vmatprep.mubr.f32.mxu0 %v357
      %480 = vmatmul.mubr.f32.gmra.mrb[0].mxu0 %v355
      %v481 = vpop.f32.mrb[0].mxu0
      %v482 = vadd.f32 0.0, %v481
      %v483 = vpop.f32.mrb[0].mxu0
      %484 = vmatprep.mubr.f32.mxu0 %v377
      %485 = vmatmul.mubr.f32.gmra.mrb[0].mxu0 %v376
      %v486 = vpop.f32.mrb[0].mxu0
      %v487 = vpop.f32.mrb[0].mxu0
      %488 = vdwg.mxu0
      %v489 = vadd.f32 %v477, 0.0
      %v490 = vadd.f32 %v482, 0.0
      %s491 = scalar_lea.vmem %s2, 256
      %v492 = vld [vmem:[%s491] sm:$0xff]
      %v493 = vld [vmem:[%s491 + $0x8] sm:$0xff]
      %v494 = vld [vmem:[%s491 + $0x10] sm:$0xff]
      %v495 = vld [vmem:[%s491 + $0x18] sm:$0xff]
      %v496 = vld [vmem:[%s491 + $0x20] sm:$0xff]
      %v497 = vld [vmem:[%s491 + $0x28] sm:$0xff]
      %v498 = vld [vmem:[%s491 + $0x30] sm:$0xff]
      %v499 = vld [vmem:[%s491 + $0x38] sm:$0xff]
      %v500 = vld [vmem:[%s491 + $0x40] sm:$0xff]
      %v501 = vld [vmem:[%s491 + $0x48] sm:$0xff]
      %v502 = vld [vmem:[%s491 + $0x50] sm:$0xff]
      %v503 = vld [vmem:[%s491 + $0x58] sm:$0xff]
      %v504 = vld [vmem:[%s491 + $0x60] sm:$0xff]
      %v505 = vld [vmem:[%s491 + $0x68] sm:$0xff]
      %v506 = vld [vmem:[%s491 + $0x70] sm:$0xff]
      %v507 = vld [vmem:[%s491 + $0x78] sm:$0xff]
      %v508 = vld [vmem:[%s491 + $0x80] sm:$0xff]
      %v509 = vld [vmem:[%s491 + $0x88] sm:$0xff]
      %v510 = vld [vmem:[%s491 + $0x90] sm:$0xff]
      %v511 = vld [vmem:[%s491 + $0x98] sm:$0xff]
      %v512 = vld [vmem:[%s491 + $0xa0] sm:$0xff]
      %v513 = vld [vmem:[%s491 + $0xa8] sm:$0xff]
      %v514 = vld [vmem:[%s491 + $0xb0] sm:$0xff]
      %v515 = vld [vmem:[%s491 + $0xb8] sm:$0xff]
      %v516 = vld [vmem:[%s491 + $0xc0] sm:$0xff]
      %v517 = vld [vmem:[%s491 + $0xc8] sm:$0xff]
      %v518 = vld [vmem:[%s491 + $0xd0] sm:$0xff]
      %v519 = vld [vmem:[%s491 + $0xd8] sm:$0xff]
      %v520 = vld [vmem:[%s491 + $0xe0] sm:$0xff]
      %v521 = vld [vmem:[%s491 + $0xe8] sm:$0xff]
      %v522 = vld [vmem:[%s491 + $0xf0] sm:$0xff]
      %v523 = vld [vmem:[%s491 + $0xf8] sm:$0xff]
      %524 = vmatprep.subr.mxu0 0.0
      %525 = vmatpush1.msra.mxu0 %v492
      %526 = vmatprep.subr.mxu0 0.0
      %527 = vmatpush1.msra.mxu0 %v493
      %528 = vmatprep.subr.mxu0 0.0
      %529 = vmatpush1.msra.mxu0 %v494
      %530 = vmatprep.subr.mxu0 0.0
      %531 = vmatpush1.msra.mxu0 %v495
      %532 = vmatprep.subr.mxu0 0.0
      %533 = vmatpush1.msra.mxu0 %v496
      %534 = vmatprep.subr.mxu0 0.0
      %535 = vmatpush1.msra.mxu0 %v497
      %536 = vmatprep.subr.mxu0 0.0
      %537 = vmatpush1.msra.mxu0 %v498
      %538 = vmatprep.subr.mxu0 0.0
      %539 = vmatpush1.msra.mxu0 %v499
      %540 = vmatprep.subr.mxu0 0.0
      %541 = vmatpush1.msra.mxu0 %v500
      %542 = vmatprep.subr.mxu0 0.0
      %543 = vmatpush1.msra.mxu0 %v501
      %544 = vmatprep.subr.mxu0 0.0
      %545 = vmatpush1.msra.mxu0 %v502
      %546 = vmatprep.subr.mxu0 0.0
      %547 = vmatpush1.msra.mxu0 %v503
      %548 = vmatprep.subr.mxu0 0.0
      %549 = vmatpush1.msra.mxu0 %v504
      %550 = vmatprep.subr.mxu0 0.0
      %551 = vmatpush1.msra.mxu0 %v505
      %552 = vmatprep.subr.mxu0 0.0
      %553 = vmatpush1.msra.mxu0 %v506
      %554 = vmatprep.subr.mxu0 0.0
      %555 = vmatpush1.msra.mxu0 %v507
      %556 = vmatprep.subr.mxu0 0.0
      %557 = vmatpush1.msra.mxu0 %v508
      %558 = vmatprep.subr.mxu0 0.0
      %559 = vmatpush1.msra.mxu0 %v509
      %560 = vmatprep.subr.mxu0 0.0
      %561 = vmatpush1.msra.mxu0 %v510
      %562 = vmatprep.subr.mxu0 0.0
      %563 = vmatpush1.msra.mxu0 %v511
      %564 = vmatprep.subr.mxu0 0.0
      %565 = vmatpush1.msra.mxu0 %v512
      %566 = vmatprep.subr.mxu0 0.0
      %567 = vmatpush1.msra.mxu0 %v513
      %568 = vmatprep.subr.mxu0 0.0
      %569 = vmatpush1.msra.mxu0 %v514
      %570 = vmatprep.subr.mxu0 0.0
      %571 = vmatpush1.msra.mxu0 %v515
      %572 = vmatprep.subr.mxu0 0.0
      %573 = vmatpush1.msra.mxu0 %v516
      %574 = vmatprep.subr.mxu0 0.0
      %575 = vmatpush1.msra.mxu0 %v517
      %576 = vmatprep.subr.mxu0 0.0
      %577 = vmatpush1.msra.mxu0 %v518
      %578 = vmatprep.subr.mxu0 0.0
      %579 = vmatpush1.msra.mxu0 %v519
      %580 = vmatprep.subr.mxu0 0.0
      %581 = vmatpush1.msra.mxu0 %v520
      %582 = vmatprep.subr.mxu0 0.0
      %583 = vmatpush1.msra.mxu0 %v521
      %584 = vmatprep.subr.mxu0 0.0
      %585 = vmatpush1.msra.mxu0 %v522
      %586 = vmatprep.subr.mxu0 0.0
      %587 = vmatpush1.msra.mxu0 %v523
      %588 = vmatprep.mubr.f32.mxu0 %v375
      %589 = vmatmul.mubr.f32.gmra.mrb[0].mxu0 %v374
      %v590 = vpop.f32.mrb[0].mxu0
      %v591 = vadd.f32 0.0, %v590
      %v592 = vpop.f32.mrb[0].mxu0
      %593 = vmatprep.mubr.f32.mxu0 %v357
      %594 = vmatmul.mubr.f32.gmra.mrb[0].mxu0 %v355
      %v595 = vpop.f32.mrb[0].mxu0
      %v596 = vadd.f32 0.0, %v595
      %v597 = vpop.f32.mrb[0].mxu0
      %598 = vmatprep.mubr.f32.mxu0 %v377
      %599 = vmatmul.mubr.f32.gmra.mrb[0].mxu0 %v376
      %v600 = vpop.f32.mrb[0].mxu0
      %v601 = vadd.f32 0.0, %v600
      %v602 = vpop.f32.mrb[0].mxu0
      %603 = vdwg.mxu0
      %vm607 = vcmask 1046528
      %v608 = vrot.slane %v591, 1
      %v609 = vrot.slane %v596, 1
      %v610 = vsel %vm607, %v608, %v609
      %v611 = vrot.slane %v601, 1
      %v612 = vsel %vm607, %v609, %v611
      %v615 = vadd.f32 %v489, %v610
      %v616 = vadd.f32 %v490, %v612
      %s617 = scalar_lea.vmem %s2, 512
      %v618 = vld [vmem:[%s617] sm:$0xff]
      %v619 = vld [vmem:[%s617 + $0x8] sm:$0xff]
      %v620 = vld [vmem:[%s617 + $0x10] sm:$0xff]
      %v621 = vld [vmem:[%s617 + $0x18] sm:$0xff]
      %v622 = vld [vmem:[%s617 + $0x20] sm:$0xff]
      %v623 = vld [vmem:[%s617 + $0x28] sm:$0xff]
      %v624 = vld [vmem:[%s617 + $0x30] sm:$0xff]
      %v625 = vld [vmem:[%s617 + $0x38] sm:$0xff]
      %v626 = vld [vmem:[%s617 + $0x40] sm:$0xff]
      %v627 = vld [vmem:[%s617 + $0x48] sm:$0xff]
      %v628 = vld [vmem:[%s617 + $0x50] sm:$0xff]
      %v629 = vld [vmem:[%s617 + $0x58] sm:$0xff]
      %v630 = vld [vmem:[%s617 + $0x60] sm:$0xff]
      %v631 = vld [vmem:[%s617 + $0x68] sm:$0xff]
      %v632 = vld [vmem:[%s617 + $0x70] sm:$0xff]
      %v633 = vld [vmem:[%s617 + $0x78] sm:$0xff]
      %v634 = vld [vmem:[%s617 + $0x80] sm:$0xff]
      %v635 = vld [vmem:[%s617 + $0x88] sm:$0xff]
      %v636 = vld [vmem:[%s617 + $0x90] sm:$0xff]
      %v637 = vld [vmem:[%s617 + $0x98] sm:$0xff]
      %v638 = vld [vmem:[%s617 + $0xa0] sm:$0xff]
      %v639 = vld [vmem:[%s617 + $0xa8] sm:$0xff]
      %v640 = vld [vmem:[%s617 + $0xb0] sm:$0xff]
      %v641 = vld [vmem:[%s617 + $0xb8] sm:$0xff]
      %v642 = vld [vmem:[%s617 + $0xc0] sm:$0xff]
      %v643 = vld [vmem:[%s617 + $0xc8] sm:$0xff]
      %v644 = vld [vmem:[%s617 + $0xd0] sm:$0xff]
      %v645 = vld [vmem:[%s617 + $0xd8] sm:$0xff]
      %v646 = vld [vmem:[%s617 + $0xe0] sm:$0xff]
      %v647 = vld [vmem:[%s617 + $0xe8] sm:$0xff]
      %v648 = vld [vmem:[%s617 + $0xf0] sm:$0xff]
      %v649 = vld [vmem:[%s617 + $0xf8] sm:$0xff]
      %650 = vmatprep.subr.mxu0 0.0
      %651 = vmatpush1.msra.mxu0 %v618
      %652 = vmatprep.subr.mxu0 0.0
      %653 = vmatpush1.msra.mxu0 %v619
      %654 = vmatprep.subr.mxu0 0.0
      %655 = vmatpush1.msra.mxu0 %v620
      %656 = vmatprep.subr.mxu0 0.0
      %657 = vmatpush1.msra.mxu0 %v621
      %658 = vmatprep.subr.mxu0 0.0
      %659 = vmatpush1.msra.mxu0 %v622
      %660 = vmatprep.subr.mxu0 0.0
      %661 = vmatpush1.msra.mxu0 %v623
      %662 = vmatprep.subr.mxu0 0.0
      %663 = vmatpush1.msra.mxu0 %v624
      %664 = vmatprep.subr.mxu0 0.0
      %665 = vmatpush1.msra.mxu0 %v625
      %666 = vmatprep.subr.mxu0 0.0
      %667 = vmatpush1.msra.mxu0 %v626
      %668 = vmatprep.subr.mxu0 0.0
      %669 = vmatpush1.msra.mxu0 %v627
      %670 = vmatprep.subr.mxu0 0.0
      %671 = vmatpush1.msra.mxu0 %v628
      %672 = vmatprep.subr.mxu0 0.0
      %673 = vmatpush1.msra.mxu0 %v629
      %674 = vmatprep.subr.mxu0 0.0
      %675 = vmatpush1.msra.mxu0 %v630
      %676 = vmatprep.subr.mxu0 0.0
      %677 = vmatpush1.msra.mxu0 %v631
      %678 = vmatprep.subr.mxu0 0.0
      %679 = vmatpush1.msra.mxu0 %v632
      %680 = vmatprep.subr.mxu0 0.0
      %681 = vmatpush1.msra.mxu0 %v633
      %682 = vmatprep.subr.mxu0 0.0
      %683 = vmatpush1.msra.mxu0 %v634
      %684 = vmatprep.subr.mxu0 0.0
      %685 = vmatpush1.msra.mxu0 %v635
      %686 = vmatprep.subr.mxu0 0.0
      %687 = vmatpush1.msra.mxu0 %v636
      %688 = vmatprep.subr.mxu0 0.0
      %689 = vmatpush1.msra.mxu0 %v637
      %690 = vmatprep.subr.mxu0 0.0
      %691 = vmatpush1.msra.mxu0 %v638
      %692 = vmatprep.subr.mxu0 0.0
      %693 = vmatpush1.msra.mxu0 %v639
      %694 = vmatprep.subr.mxu0 0.0
      %695 = vmatpush1.msra.mxu0 %v640
      %696 = vmatprep.subr.mxu0 0.0
      %697 = vmatpush1.msra.mxu0 %v641
      %698 = vmatprep.subr.mxu0 0.0
      %699 = vmatpush1.msra.mxu0 %v642
      %700 = vmatprep.subr.mxu0 0.0
      %701 = vmatpush1.msra.mxu0 %v643
      %702 = vmatprep.subr.mxu0 0.0
      %703 = vmatpush1.msra.mxu0 %v644
      %704 = vmatprep.subr.mxu0 0.0
      %705 = vmatpush1.msra.mxu0 %v645
      %706 = vmatprep.subr.mxu0 0.0
      %707 = vmatpush1.msra.mxu0 %v646
      %708 = vmatprep.subr.mxu0 0.0
      %709 = vmatpush1.msra.mxu0 %v647
      %710 = vmatprep.subr.mxu0 0.0
      %711 = vmatpush1.msra.mxu0 %v648
      %712 = vmatprep.subr.mxu0 0.0
      %713 = vmatpush1.msra.mxu0 %v649
      %714 = vmatprep.mubr.f32.mxu0 %v375
      %715 = vmatmul.mubr.f32.gmra.mrb[0].mxu0 %v374
      %v716 = vpop.f32.mrb[0].mxu0
      %v717 = vadd.f32 0.0, %v716
      %v718 = vpop.f32.mrb[0].mxu0
      %719 = vmatprep.mubr.f32.mxu0 %v357
      %720 = vmatmul.mubr.f32.gmra.mrb[0].mxu0 %v355
      %v721 = vpop.f32.mrb[0].mxu0
      %v722 = vadd.f32 0.0, %v721
      %v723 = vpop.f32.mrb[0].mxu0
      %724 = vmatprep.mubr.f32.mxu0 %v377
      %725 = vmatmul.mubr.f32.gmra.mrb[0].mxu0 %v376
      %v726 = vpop.f32.mrb[0].mxu0
      %v727 = vadd.f32 0.0, %v726
      %v728 = vpop.f32.mrb[0].mxu0
      %729 = vdwg.mxu0
      %vm733 = vcmask 1045504
      %v734 = vrot.slane %v717, 2
      %v735 = vrot.slane %v722, 2
      %v736 = vsel %vm733, %v734, %v735
      %v737 = vrot.slane %v727, 2
      %v738 = vsel %vm733, %v735, %v737
      %v741 = vadd.f32 %v615, %v736
      %v742 = vadd.f32 %v616, %v738
      %v743 = vld [vmem:[%s3] sm:$0x1]
      %v745 = vlaneseq
      %v746 = vshrl.u32 %v745, 7
      %v747 = vsub.s32 0, %v746
      %v748 = vrot.slane %v743, %v747
      %v750 = vadd.f32 %v741, %v748
      %v751 = vadd.f32 %v742, %v748
      %v752 = vmax.f32 %v750, 0.0
      %v753 = vmax.f32 %v751, 0.0
      %v754 = vld [vmem:[%s4] sm:$0xff]
      %v755 = vld [vmem:[%s4 + $0x8] sm:$0xff]
      %v756 = vld [vmem:[%s4 + $0x10] sm:$0xff]
      %v757 = vld [vmem:[%s4 + $0x18] sm:$0xff]
      %v758 = vld [vmem:[%s4 + $0x20] sm:$0xff]
      %v759 = vld [vmem:[%s4 + $0x28] sm:$0xff]
      %v760 = vld [vmem:[%s4 + $0x30] sm:$0xff]
      %v761 = vld [vmem:[%s4 + $0x38] sm:$0xff]
      %s762 = sld [smem:[#allocation2]]
      %v763 = vstv %s762
      %vm764 = vcmask 261120
      %v766 = vsel %vm764, %v752, 0
      %v769 = vsel %vm764, %v753, 0
      %771 = vmatprep.subr.mxu0 %v755
      %772 = vmatpush1.msra.mxu0 %v754
      %773 = vmatprep.subr.mxu0 %v757
      %774 = vmatpush1.msra.mxu0 %v756
      %775 = vmatprep.subr.mxu0 %v759
      %776 = vmatpush1.msra.mxu0 %v758
      %777 = vmatprep.subr.mxu0 %v761
      %778 = vmatpush1.msra.mxu0 %v760
      %779 = vmatprep.subr.mxu0 0.0
      %780 = vmatpush1.msra.mxu0 0.0
      %781 = vmatprep.subr.mxu0 0.0
      %782 = vmatpush1.msra.mxu0 0.0
      %783 = vmatprep.subr.mxu0 0.0
      %784 = vmatpush1.msra.mxu0 0.0
      %785 = vmatprep.subr.mxu0 0.0
      %786 = vmatpush1.msra.mxu0 0.0
      %787 = vmatprep.subr.mxu0 0.0
      %788 = vmatpush1.msra.mxu0 0.0
      %789 = vmatprep.subr.mxu0 0.0
      %790 = vmatpush1.msra.mxu0 0.0
      %791 = vmatprep.subr.mxu0 0.0
      %792 = vmatpush1.msra.mxu0 0.0
      %793 = vmatprep.subr.mxu0 0.0
      %794 = vmatpush1.msra.mxu0 0.0
      %795 = vmatprep.subr.mxu0 0.0
      %796 = vmatpush1.msra.mxu0 0.0
      %797 = vmatprep.subr.mxu0 0.0
      %798 = vmatpush1.msra.mxu0 0.0
      %799 = vmatprep.subr.mxu0 0.0
      %800 = vmatpush1.msra.mxu0 0.0
      %801 = vmatprep.subr.mxu0 0.0
      %802 = vmatpush1.msra.mxu0 0.0
      %803 = vmatprep.subr.mxu0 0.0
      %804 = vmatpush1.msra.mxu0 0.0
      %805 = vmatprep.subr.mxu0 0.0
      %806 = vmatpush1.msra.mxu0 0.0
      %807 = vmatprep.subr.mxu0 0.0
      %808 = vmatpush1.msra.mxu0 0.0
      %809 = vmatprep.subr.mxu0 0.0
      %810 = vmatpush1.msra.mxu0 0.0
      %811 = vmatprep.subr.mxu0 0.0
      %812 = vmatpush1.msra.mxu0 0.0
      %813 = vmatprep.subr.mxu0 0.0
      %814 = vmatpush1.msra.mxu0 0.0
      %815 = vmatprep.subr.mxu0 0.0
      %816 = vmatpush1.msra.mxu0 0.0
      %817 = vmatprep.subr.mxu0 0.0
      %818 = vmatpush1.msra.mxu0 0.0
      %819 = vmatprep.subr.mxu0 0.0
      %820 = vmatpush1.msra.mxu0 0.0
      %821 = vmatprep.subr.mxu0 0.0
      %822 = vmatpush1.msra.mxu0 0.0
      %823 = vmatprep.subr.mxu0 0.0
      %824 = vmatpush1.msra.mxu0 0.0
      %825 = vmatprep.subr.mxu0 0.0
      %826 = vmatpush1.msra.mxu0 0.0
      %827 = vmatprep.subr.mxu0 0.0
      %828 = vmatpush1.msra.mxu0 0.0
      %829 = vmatprep.subr.mxu0 0.0
      %830 = vmatpush1.msra.mxu0 0.0
      %831 = vmatprep.subr.mxu0 0.0
      %832 = vmatpush1.msra.mxu0 0.0
      %833 = vmatprep.subr.mxu0 0.0
      %834 = vmatpush1.msra.mxu0 0.0
      %835 = vmatprep.mubr.f32.mxu0 0.0
      %836 = vmatmul.mubr.f32.gmra.mrb[0].mxu0 %v766
      %v837 = vpop.f32.mrb[0].mxu0
      %v838 = vadd.f32 %v763, %v837
      %v839 = vpop.f32.mrb[0].mxu0
      %v840 = vadd.f32 %v763, %v839
      %841 = vmatprep.mubr.f32.mxu0 0.0
      %842 = vmatmul.mubr.f32.gmra.mrb[0].mxu0 %v769
      %v843 = vpop.f32.mrb[0].mxu0
      %v844 = vadd.f32 %v763, %v843
      %v845 = vpop.f32.mrb[0].mxu0
      %v846 = vadd.f32 %v763, %v845
      %847 = vdwg.mxu0
      %v848 = vxor.u32 %v838, 2147483648
      %v849 = vxor.u32 %v840, 2147483648
      %v850 = vxor.u32 %v844, 2147483648
      %v851 = vxor.u32 %v846, 2147483648
      %v852 = vmul.f32 %v848, 1.442695
      %v853 = vpow.pop %v852
      %v854 = vmul.f32 %v849, 1.442695
      %v855 = vpow.pop %v854
      %v856 = vmul.f32 %v850, 1.442695
      %v857 = vpow.pop %v856
      %v858 = vmul.f32 %v851, 1.442695
      %v859 = vpow.pop %v858
      %v860 = vadd.f32 %v853, 1.0
      %v861 = vadd.f32 %v855, 1.0
      %v862 = vadd.f32 %v857, 1.0
      %v863 = vadd.f32 %v859, 1.0
      %v864 = vrcp.pop %v860
      %v865 = vmul.f32 1.0, %v864
      %v866 = vrcp.pop %v861
      %v867 = vmul.f32 1.0, %v866
      %v868 = vrcp.pop %v862
      %v869 = vmul.f32 1.0, %v868
      %v870 = vrcp.pop %v863
      %v871 = vmul.f32 1.0, %v870
      %v872 = vmul.f32 %v331, %v865
      %v873 = vmul.f32 %v332, %v867
      %v874 = vmul.f32 %v333, %v869
      %v875 = vmul.f32 %v334, %v871
      %876 = vst [vmem:[%s329] sm:$0xff] %v872
      %877 = vst [vmem:[%s329 + $0x8] sm:$0xff] %v873
      %878 = vst [vmem:[%s329 + $0x10] sm:$0xff] %v874
      %879 = vst [vmem:[%s329 + $0x18] sm:$0xff] %v875
      %s880 = smul.u32 2, %s23
      %p881 = scmp.lt.s32.totalorder %s22, 1
      %s882 = scalar_select %p881, %s22, 1
      %p883 = scmp.lt.s32.totalorder %s880, 1
      %s884 = scalar_select %p883, %s880, 1
      %s885 = smul.addr %s884, 2
      %s886 = smul.addr %s882, 4
      %s887 = sadd.s32 %s885, %s886
      %s888 = smul.addr %s887, 8
      %s889 = scalar_lea.vmem %s6, %s888
      // Predicated region
      $region45: #{pa_layer_nhwc.1} parent=43 // pred_check
        %p890 = pneg %p190
      $region46: #{pa_layer_nhwc.1} parent=43 // pred_check_branch
        %892 = sbr.rel (%p890) target = $region48
      $region47: #{pa_layer_nhwc.1} parent=43 // pred_region
        %s893 = smul.u32 2, %s23
      $region48: #{pa_layer_nhwc.1} parent=43 // pred_fallthru
        _
    $region44: #{pa_layer_nhwc.1} parent=5 // pred_fallthru
      _
    %p894 = scmp.le.s32.totalorder 2, %s13
    // Predicated region
    $region49: #{pa_layer_nhwc.1} parent=5 // pred_check
      %p895 = pneg %p894
    $region50: #{pa_layer_nhwc.1} parent=5 // pred_check_branch
      %897 = sbr.rel (%p895) target = $region52
    $region51: #{pa_layer_nhwc.1} parent=5 // pred_region
      %s898 = ssub.s32 %s13, 2
      // Predicated region
      $region53: #{pa_layer_nhwc.1} parent=51 // pred_check
        %p899 = pneg %p196
      $region54: #{pa_layer_nhwc.1} parent=51 // pred_check_branch
        %901 = sbr.rel (%p899) target = $region56
      $region55: #{pa_layer_nhwc.1} parent=51 // pred_region
        %s902 = smul.u32 2, %s25
        %p903 = scmp.lt.s32.totalorder %s24, 1
        %s904 = scalar_select %p903, %s24, 1
        %p905 = scmp.lt.s32.totalorder %s902, 1
        %s906 = scalar_select %p905, %s902, 1
        %s907 = smul.addr %s906, 2
        %s908 = smul.addr %s904, 4
        %s909 = sadd.s32 %s907, %s908
        %s910 = smul.addr %s909, 8
        %s911 = scalar_lea.vmem %s6, %s910
      $region56: #{pa_layer_nhwc.1} parent=51 // pred_fallthru
        _
    $region52: #{pa_layer_nhwc.1} parent=5 // pred_fallthru
      _
  $region6: #{pa_layer_nhwc.1} parent=0 // loop_footer
    %s17 = sadd.s32 1, %s13
  $region7: #{pa_layer_nhwc.1} parent=0 // loop_footer_branch
    %12 = sbr.rel target = $region3
  $region8: #{pa_layer_nhwc.1} parent=0 // loop_exit
    _

</llo_original>
